<compile_context>
chip_gen: v5e
topology: v5e:2x2
jax: 0.10.0
libtpu: 0.0.40
codegen_flags: <defaults>
</compile_context>

<pallas_src>
import math
import functools

import jax
import jax.numpy as jnp
from jax.experimental import pallas as pl
from jax.experimental.pallas import tpu as pltpu

_NEG_BIG = -1e30   # finite "minus infinity" for causal masking (no NaN rows)


# --------------------------------------------------------------------------- #
# Kernel 1: RMSNorm -> per-head QKV projection -> RoPE (+ fold 1/sqrt(hd))
# grid = (B, T tiles, n_head)   (all parallel)
# --------------------------------------------------------------------------- #
def qkv_rope_kernel(x_ref, wln_ref, wqkv_ref, cos_ref, sin_ref,
                    q_ref, k_ref, v_ref, *, head_dim):
    hd = head_dim
    half = hd // 2

    # RMSNorm in f32 on the VPU; matmul operands cast to bf16 for the MXU.
    x = x_ref[0].astype(jnp.float32)                      # (tq, C)
    ms = jnp.mean(x * x, axis=-1, keepdims=True)
    xn = x * jax.lax.rsqrt(ms + 1e-5) * wln_ref[0].astype(jnp.float32)
    xn = xn.astype(wqkv_ref.dtype)                        # bf16

    w = wqkv_ref[0]                                       # (C, 3*hd) = [Wq|Wk|Wv]
    qkv = jnp.dot(xn, w, preferred_element_type=jnp.float32)   # (tq, 3*hd) f32
    q = qkv[:, :hd]
    k = qkv[:, hd:2 * hd]
    v = qkv[:, 2 * hd:]

    cos = cos_ref[...]                                    # (tq, hd) f32
    sin = sin_ref[...]

    def rot_half(t):
        if hd % 128 == 0:
            # XLU lane-rotate + sign mask: no slice/concat VMEM copies.
            col = jax.lax.broadcasted_iota(jnp.int32, t.shape, 1)
            sign = jnp.where(col < half, -1.0, 1.0).astype(t.dtype)
            return pltpu.roll(t, shift=half, axis=-1) * sign
        # Small / unaligned head_dim fallback (e.g. the tiny test shapes).
        return jnp.concatenate([-t[:, half:], t[:, :half]], axis=-1)

    def rope(t):
        return t * cos + rot_half(t) * sin

    scale = 1.0 / math.sqrt(hd)      # fold into q: O(T*hd) instead of O(T^2)
    q_ref[0, 0] = (rope(q) * scale).astype(q_ref.dtype)
    k_ref[0, 0] = rope(k).astype(k_ref.dtype)
    v_ref[0, 0] = v.astype(v_ref.dtype)


# --------------------------------------------------------------------------- #
# Kernel 2: flash causal attention + output projection + residual
# grid = (B, q tiles, n_head, kv tiles)   (parallel, parallel, arbitrary, arbitrary)
# --------------------------------------------------------------------------- #
def flash_attn_proj_kernel(x_ref, q_ref, k_ref, v_ref, wproj_ref, o_ref,
                           m_ref, l_ref, acc_ref, oacc_ref, *, t_q, t_kv):
    qt = pl.program_id(1)
    h = pl.program_id(2)
    kt = pl.program_id(3)
    n_h = pl.num_programs(2)
    n_kt = pl.num_programs(3)

    @pl.when(jnp.logical_and(h == 0, kt == 0))
    def _():                                   # per (b, q-tile): projection acc
        oacc_ref[...] = jnp.zeros_like(oacc_ref)

    @pl.when(kt == 0)
    def _():                                   # per head: online-softmax state
        m_ref[...] = jnp.full_like(m_ref, _NEG_BIG)
        l_ref[...] = jnp.zeros_like(l_ref)
        acc_ref[...] = jnp.zeros_like(acc_ref)

    q_start = qt * t_q
    k_start = kt * t_kv

    # Skip kv tiles strictly above the causal diagonal (~2x fewer MXU flops).
    @pl.when(k_start <= q_start + (t_q - 1))
    def _():
        q = q_ref[0, 0]                        # (t_q, hd) bf16, pre-scaled
        k = k_ref[0, 0]                        # (t_kv, hd) bf16
        v = v_ref[0, 0]                        # (t_kv, hd) bf16
        s = jnp.dot(q, k.T, preferred_element_type=jnp.float32)   # (t_q, t_kv)
        row = q_start + jax.lax.broadcasted_iota(jnp.int32, s.shape, 0)
        col = k_start + jax.lax.broadcasted_iota(jnp.int32, s.shape, 1)
        s = jnp.where(row >= col, s, _NEG_BIG)

        m_prev = m_ref[...]
        m_new = jnp.maximum(m_prev, jnp.max(s, axis=-1, keepdims=True))
        alpha = jnp.exp(m_prev - m_new)
        p = jnp.exp(s - m_new)
        l_ref[...] = alpha * l_ref[...] + jnp.sum(p, axis=-1, keepdims=True)
        acc_ref[...] = alpha * acc_ref[...] + jnp.dot(
            p.astype(v.dtype), v, preferred_element_type=jnp.float32)
        m_ref[...] = m_new

    # Last kv tile of this head: normalize, project this head's slice of Wproj,
    # and accumulate into the shared (t_q, C) f32 accumulator (sum over heads).
    @pl.when(kt == n_kt - 1)
    def _():
        y = acc_ref[...] * pl.reciprocal(l_ref[...], approx=True)   # (t_q, hd)
        oacc_ref[...] += jnp.dot(y.astype(wproj_ref.dtype), wproj_ref[0],
                                 preferred_element_type=jnp.float32)

    # Last head: add residual and emit the (t_q, C) output tile (lane-dense).
    @pl.when(jnp.logical_and(h == n_h - 1, kt == n_kt - 1))
    def _():
        o_ref[0] = (x_ref[0].astype(jnp.float32) + oacc_ref[...]).astype(o_ref.dtype)


# --------------------------------------------------------------------------- #
# Kernel 3: RMSNorm -> SwiGLU MLP tiled over hidden dim H -> residual
# grid = (B, T tiles, H tiles)   (parallel, parallel, arbitrary)
# --------------------------------------------------------------------------- #
def mlp_kernel(x_ref, wln_ref, w12_ref, w3_ref, o_ref, xn_ref, acc_ref):
    j = pl.program_id(2)
    n_j = pl.num_programs(2)

    @pl.when(j == 0)
    def _():
        x = x_ref[0].astype(jnp.float32)                  # (t, C)
        ms = jnp.mean(x * x, axis=-1, keepdims=True)
        xn = x * jax.lax.rsqrt(ms + 1e-5) * wln_ref[0].astype(jnp.float32)
        xn_ref[...] = xn.astype(xn_ref.dtype)             # cache normed acts (bf16)
        acc_ref[...] = jnp.zeros_like(acc_ref)

    xn = xn_ref[...]
    h = jnp.dot(xn, w12_ref[0], preferred_element_type=jnp.float32)   # fc_1 tile
    g = jnp.dot(xn, w12_ref[1], preferred_element_type=jnp.float32)   # fc_2 tile
    act = h * (g * jax.nn.sigmoid(g))                     # SiLU(g) * h, f32
    acc_ref[...] += jnp.dot(act.astype(w3_ref.dtype), w3_ref[...],
                            preferred_element_type=jnp.float32)

    @pl.when(j == n_j - 1)
    def _():
        o_ref[0] = (x_ref[0].astype(jnp.float32) + acc_ref[...]).astype(o_ref.dtype)


# --------------------------------------------------------------------------- #
# Wrapper
# --------------------------------------------------------------------------- #
def llama_block(x, params, n_head, *, t_tile=None, kv_tile=None, h_tile=None,
                compute_dtype=jnp.bfloat16):
    B, T, C = x.shape
    assert C % n_head == 0
    hd = C // n_head
    H = params["w1"].shape[1]

    # ---- tile selection: biggest-that-fits heuristic; re-sweep per TPU gen
    # (v7x: 64 MiB VMEM; keep (2 buffers x inputs + accumulators) under budget).
    if t_tile is None:
        t_tile = T if T <= 128 else 128
    if kv_tile is None:
        kv_tile = T if T <= 128 else 128
    if h_tile is None:
        h_tile = H
        for cand in (512, 256, 128):
            if H % cand == 0 and H > cand:
                h_tile = cand
                break
    assert T % t_tile == 0 and T % kv_tile == 0 and H % h_tile == 0
    assert (t_tile % 8 == 0 or t_tile == T) and (kv_tile % 8 == 0 or kv_tile == T)
    assert h_tile % 128 == 0 or h_tile == H
    n_t, n_kv, n_h = T // t_tile, T // kv_tile, H // h_tile

    # ---- RoPE tables (plain-JAX glue).
    inv_freq = 1.0 / (10000.0 ** (jnp.arange(0, hd, 2, dtype=jnp.float32) / hd))
    freqs = jnp.arange(T, dtype=jnp.float32)[:, None] * inv_freq[None, :]
    emb = jnp.concatenate([freqs, freqs], axis=-1)        # (T, hd)
    cos, sin = jnp.cos(emb), jnp.sin(emb)

    # ---- weight layout / dtype prep (done once at load time in a real model).
    cd = compute_dtype
    #   wqkv  (C, 3C) -> (n_head, C, 3*hd) : per-head [Wq_h | Wk_h | Wv_h]
    wqkv3 = (params["wqkv"].reshape(C, 3, n_head, hd)
             .transpose(2, 0, 1, 3).reshape(n_head, C, 3 * hd).astype(cd))
    #   wproj (C, C)  -> (n_head, hd, C)
    wproj_r = params["wproj"].reshape(n_head, hd, C).astype(cd)
    #   fc_1 / fc_2   -> stacked (2, C, H): one weight stream per H tile
    w12 = jnp.stack([params["w1"], params["w2"]], axis=0).astype(cd)
    w3 = params["w3"].astype(cd)
    ln1 = params["ln1_w"].astype(jnp.float32)
    ln2 = params["ln2_w"].astype(jnp.float32)

    def cparams(sem):
        return pltpu.CompilerParams(dimension_semantics=sem,
                                    vmem_limit_bytes=32 * 1024 * 1024)

    # ---- kernel 1: RMSNorm -> QKV -> RoPE ----------------------------------
    prep_cost = pl.CostEstimate(
        flops=2 * B * T * C * 3 * C,
        transcendentals=B * T * n_head,
        bytes_accessed=int(x.size) * 4 + n_head * C * 3 * hd * 2
                       + 3 * B * n_head * T * hd * 2)
    q, k, v = pl.pallas_call(
        functools.partial(qkv_rope_kernel, head_dim=hd),
        out_shape=[jax.ShapeDtypeStruct((B, n_head, T, hd), cd)] * 3,
        grid=(B, n_t, n_head),
        in_specs=[
            pl.BlockSpec((1, t_tile, C), lambda b, t, h: (b, t, 0)),
            pl.BlockSpec((1, C), lambda b, t, h: (0, 0)),
            pl.BlockSpec((1, C, 3 * hd), lambda b, t, h: (h, 0, 0)),
            pl.BlockSpec((t_tile, hd), lambda b, t, h: (t, 0)),
            pl.BlockSpec((t_tile, hd), lambda b, t, h: (t, 0)),
        ],
        out_specs=[pl.BlockSpec((1, 1, t_tile, hd),
                                lambda b, t, h: (b, h, t, 0))] * 3,
        compiler_params=cparams(("parallel", "parallel", "parallel")),
        cost_estimate=prep_cost,
    )(x, ln1, wqkv3, cos, sin)

    # ---- kernel 2: flash attention + proj + residual -----------------------
    attn_cost = pl.CostEstimate(
        flops=4 * B * n_head * T * T * hd + 2 * B * T * C * C,
        transcendentals=B * n_head * T * T,
        bytes_accessed=2 * int(x.size) * 4 + 3 * B * n_head * T * hd * 2 + C * C * 2)
    attn_out = pl.pallas_call(
        functools.partial(flash_attn_proj_kernel, t_q=t_tile, t_kv=kv_tile),
        out_shape=jax.ShapeDtypeStruct((B, T, C), x.dtype),
        grid=(B, n_t, n_head, n_kv),
        in_specs=[
            pl.BlockSpec((1, t_tile, C), lambda b, qt, h, kt: (b, qt, 0)),          # residual
            pl.BlockSpec((1, 1, t_tile, hd), lambda b, qt, h, kt: (b, h, qt, 0)),   # q
            pl.BlockSpec((1, 1, kv_tile, hd), lambda b, qt, h, kt: (b, h, kt, 0)),  # k
            pl.BlockSpec((1, 1, kv_tile, hd), lambda b, qt, h, kt: (b, h, kt, 0)),  # v
            pl.BlockSpec((1, hd, C), lambda b, qt, h, kt: (h, 0, 0)),               # Wproj_h
        ],
        out_specs=pl.BlockSpec((1, t_tile, C), lambda b, qt, h, kt: (b, qt, 0)),
        scratch_shapes=[
            pltpu.VMEM((t_tile, 1), jnp.float32),    # m
            pltpu.VMEM((t_tile, 1), jnp.float32),    # l
            pltpu.VMEM((t_tile, hd), jnp.float32),   # per-head acc
            pltpu.VMEM((t_tile, C), jnp.float32),    # projection accumulator
        ],
        compiler_params=cparams(("parallel", "parallel", "arbitrary", "arbitrary")),
        cost_estimate=attn_cost,
    )(x, q, k, v, wproj_r)

    # ---- kernel 3: SwiGLU MLP tiled over H + residual -----------------------
    mlp_cost = pl.CostEstimate(
        flops=6 * B * T * C * H,
        transcendentals=B * T * H,
        bytes_accessed=2 * int(x.size) * 4 + 3 * C * H * 2)
    out = pl.pallas_call(
        mlp_kernel,
        out_shape=jax.ShapeDtypeStruct((B, T, C), x.dtype),
        grid=(B, n_t, n_h),
        in_specs=[
            pl.BlockSpec((1, t_tile, C), lambda b, t, j: (b, t, 0)),
            pl.BlockSpec((1, C), lambda b, t, j: (0, 0)),
            pl.BlockSpec((2, C, h_tile), lambda b, t, j: (0, 0, j)),
            pl.BlockSpec((h_tile, C), lambda b, t, j: (j, 0)),
        ],
        out_specs=pl.BlockSpec((1, t_tile, C), lambda b, t, j: (b, t, 0)),
        scratch_shapes=[
            pltpu.VMEM((t_tile, C), cd),             # cached xn
            pltpu.VMEM((t_tile, C), jnp.float32),    # accumulator over H tiles
        ],
        compiler_params=cparams(("parallel", "parallel", "arbitrary")),
        cost_estimate=mlp_cost,
    )(attn_out, ln2, w12, w3)
    return out


# --------------------------------------------------------------------------- #
# Pure-JAX f32 reference (mirrors the PyTorch module)
# --------------------------------------------------------------------------- #
def llama_block_ref(x, params, n_head):
    B, T, C = x.shape
    hd = C // n_head

    def rms(v, w):
        vf = v.astype(jnp.float32)
        return (vf * jax.lax.rsqrt(jnp.mean(vf * vf, -1, keepdims=True) + 1e-5)) * w[0]

    inv_freq = 1.0 / (10000.0 ** (jnp.arange(0, hd, 2, dtype=jnp.float32) / hd))
    freqs = jnp.arange(T, dtype=jnp.float32)[:, None] * inv_freq[None, :]
    emb = jnp.concatenate([freqs, freqs], -1)
    cos, sin = jnp.cos(emb), jnp.sin(emb)

    def rope(t):  # (B, nh, T, hd)
        t1, t2 = t[..., :hd // 2], t[..., hd // 2:]
        return t * cos + jnp.concatenate([-t2, t1], -1) * sin

    xn = rms(x, params["ln1_w"])
    qkv = xn @ params["wqkv"]
    q, k, v = jnp.split(qkv, 3, axis=-1)
    rs = lambda t: t.reshape(B, T, n_head, hd).transpose(0, 2, 1, 3)
    q, k, v = rope(rs(q)), rope(rs(k)), rs(v)
    att = jnp.einsum("bhqd,bhkd->bhqk", q, k) / math.sqrt(hd)
    mask = jnp.tril(jnp.ones((T, T), dtype=bool))
    att = jnp.where(mask, att, -jnp.inf)
    att = jax.nn.softmax(att, axis=-1)
    y = jnp.einsum("bhqk,bhkd->bhqd", att, v).transpose(0, 2, 1, 3).reshape(B, T, C)
    x = x + y @ params["wproj"]

    xn = rms(x, params["ln2_w"])
    h = xn @ params["w1"]
    g = xn @ params["w2"]
    return x + (jax.nn.silu(g) * h) @ params["w3"]


if __name__ == "__main__":
    B, T, C, n_head = 2, 16, 32, 4
    hidden = 256 * ((int(8 * C / 3) + 255) // 256)   # MLP.__init__ -> 256

    key = jax.random.PRNGKey(0)
    ks = jax.random.split(key, 8)
    params = {
        "ln1_w": 1.0 + 0.1 * jax.random.normal(ks[6], (1, C), jnp.float32),
        "ln2_w": 1.0 + 0.1 * jax.random.normal(ks[7], (1, C), jnp.float32),
        "wqkv":  0.02 * jax.random.normal(ks[0], (C, 3 * C), jnp.float32),
        "wproj": 0.02 * jax.random.normal(ks[1], (C, C), jnp.float32),
        "w1":    0.02 * jax.random.normal(ks[2], (C, hidden), jnp.float32),
        "w2":    0.02 * jax.random.normal(ks[3], (C, hidden), jnp.float32),
        "w3":    0.02 * jax.random.normal(ks[4], (hidden, C), jnp.float32),
    }
    x = jax.random.normal(ks[5], (B, T, C), jnp.float32)

    # Small tiles chosen deliberately so the flash (2 q-tiles x 2 kv-tiles with
    # diagonal skip) and H-tiled MLP accumulation paths each take >1 grid step.
    out = jax.block_until_ready(
        llama_block(x, params, n_head, t_tile=8, kv_tile=8, h_tile=128))
    ref = jax.block_until_ready(llama_block_ref(x, params, n_head))

    assert out.shape == (B, T, C)
    max_err = float(jnp.max(jnp.abs(out - ref)))
    assert jnp.allclose(out, ref, rtol=2e-2, atol=2e-2), f"mismatch vs ref: {max_err}"
    print("KERNEL_OK")
</pallas_src>

<mosaic_0001>
module attributes {stable_mosaic.version = 11 : i64} {
  func.func @qkv_rope_kernel(%arg0: i32, %arg1: i32, %arg2: i32, %arg3: memref<1x8x32xf32, #tpu.memory_space<vmem>>, %arg4: memref<1x32xf32, #tpu.memory_space<vmem>>, %arg5: memref<1x32x24xbf16, #tpu.memory_space<vmem>>, %arg6: memref<8x8xf32, #tpu.memory_space<vmem>>, %arg7: memref<8x8xf32, #tpu.memory_space<vmem>>, %arg8: memref<1x1x8x8xbf16, #tpu.memory_space<vmem>>, %arg9: memref<1x1x8x8xbf16, #tpu.memory_space<vmem>>, %arg10: memref<1x1x8x8xbf16, #tpu.memory_space<vmem>>) attributes {dimension_semantics = [#tpu.dimension_semantics<parallel>, #tpu.dimension_semantics<parallel>, #tpu.dimension_semantics<parallel>], iteration_bounds = array<i64: 2, 2, 4>, scalar_prefetch = 0 : i64, scratch_operands = 0 : i64, tpu.core_type = #tpu.core_type<tc>, window_params = [{transform_indices = @transform_0, window_bounds = array<i64: 1, 8, 32>}, {pipeline_mode = #tpu.pipeline_mode<synchronous>, transform_indices = @transform_1, window_bounds = array<i64: 1, 32>}, {transform_indices = @transform_2, window_bounds = array<i64: 1, 32, 24>}, {transform_indices = @transform_3, window_bounds = array<i64: 8, 8>}, {transform_indices = @transform_4, window_bounds = array<i64: 8, 8>}, {transform_indices = @transform_5, window_bounds = array<i64: 1, 1, 8, 8>}, {transform_indices = @transform_6, window_bounds = array<i64: 1, 1, 8, 8>}, {transform_indices = @transform_7, window_bounds = array<i64: 1, 1, 8, 8>}]} {
    %c0 = arith.constant 0 : index
    %c0_0 = arith.constant 0 : index
    %c0_1 = arith.constant 0 : index
    %0 = vector.load %arg3[%c0, %c0_0, %c0_1] : memref<1x8x32xf32, #tpu.memory_space<vmem>>, vector<1x8x32xf32>
    %1 = vector.shape_cast %0 : vector<1x8x32xf32> to vector<8x32xf32>
    %2 = arith.mulf %1, %1 : vector<8x32xf32>
    %cst = arith.constant dense<0.000000e+00> : vector<8xf32>
    %3 = vector.multi_reduction <add>, %2, %cst [1] : vector<8x32xf32> to vector<8xf32>
    %4 = vector.shape_cast %3 : vector<8xf32> to vector<8x1xf32>
    %cst_2 = arith.constant 3.200000e+01 : f32
    %5 = vector.broadcast %cst_2 : f32 to vector<8x1xf32>
    %6 = arith.divf %4, %5 : vector<8x1xf32>
    %cst_3 = arith.constant 9.99999974E-6 : f32
    %7 = vector.broadcast %cst_3 : f32 to vector<8x1xf32>
    %8 = arith.addf %6, %7 : vector<8x1xf32>
    %9 = math.rsqrt %8 : vector<8x1xf32>
    %10 = vector.broadcast %9 : vector<8x1xf32> to vector<8x32xf32>
    %11 = arith.mulf %1, %10 : vector<8x32xf32>
    %c0_4 = arith.constant 0 : index
    %c0_5 = arith.constant 0 : index
    %12 = vector.load %arg4[%c0_4, %c0_5] : memref<1x32xf32, #tpu.memory_space<vmem>>, vector<1x32xf32>
    %13 = vector.shape_cast %12 : vector<1x32xf32> to vector<32xf32>
    %14 = vector.shape_cast %13 : vector<32xf32> to vector<1x32xf32>
    %15 = vector.broadcast %14 : vector<1x32xf32> to vector<8x32xf32>
    %16 = arith.mulf %11, %15 : vector<8x32xf32>
    %17 = arith.truncf %16 : vector<8x32xf32> to vector<8x32xbf16>
    %c0_6 = arith.constant 0 : index
    %c0_7 = arith.constant 0 : index
    %c0_8 = arith.constant 0 : index
    %18 = vector.load %arg5[%c0_6, %c0_7, %c0_8] : memref<1x32x24xbf16, #tpu.memory_space<vmem>>, vector<1x32x24xbf16>
    %19 = vector.shape_cast %18 : vector<1x32x24xbf16> to vector<32x24xbf16>
    %cst_9 = arith.constant dense<0.000000e+00> : vector<8x24xf32>
    %20 = tpu.matmul %17, %19, %cst_9 {dimension_numbers = #tpu.dot_dimension_numbers<[1], [0], [0], [1], [0, 0, 1, 1], [], []>} : vector<8x32xbf16>, vector<32x24xbf16>, vector<8x24xf32> -> vector<8x24xf32>
    %21 = vector.extract_strided_slice %20 {offsets = [0, 0], sizes = [8, 8], strides = [1, 1]} : vector<8x24xf32> to vector<8x8xf32>
    %22 = vector.extract_strided_slice %20 {offsets = [0, 8], sizes = [8, 8], strides = [1, 1]} : vector<8x24xf32> to vector<8x8xf32>
    %23 = vector.extract_strided_slice %20 {offsets = [0, 16], sizes = [8, 8], strides = [1, 1]} : vector<8x24xf32> to vector<8x8xf32>
    %c0_10 = arith.constant 0 : index
    %c0_11 = arith.constant 0 : index
    %24 = vector.load %arg6[%c0_10, %c0_11] : memref<8x8xf32, #tpu.memory_space<vmem>>, vector<8x8xf32>
    %c0_12 = arith.constant 0 : index
    %c0_13 = arith.constant 0 : index
    %25 = vector.load %arg7[%c0_12, %c0_13] : memref<8x8xf32, #tpu.memory_space<vmem>>, vector<8x8xf32>
    %26 = arith.mulf %21, %24 : vector<8x8xf32>
    %27 = vector.extract_strided_slice %21 {offsets = [0, 4], sizes = [8, 4], strides = [1, 1]} : vector<8x8xf32> to vector<8x4xf32>
    %cst_14 = arith.constant 0.000000e+00 : f32
    %28 = vector.broadcast %cst_14 : f32 to vector<8x4xf32>
    %29 = arith.subf %28, %27 : vector<8x4xf32>
    %30 = vector.extract_strided_slice %21 {offsets = [0, 0], sizes = [8, 4], strides = [1, 1]} : vector<8x8xf32> to vector<8x4xf32>
    %31 = tpu.concatenate %29, %30 in 1 : vector<8x4xf32>, vector<8x4xf32> -> vector<8x8xf32>
    %32 = arith.mulf %31, %25 : vector<8x8xf32>
    %33 = arith.addf %26, %32 : vector<8x8xf32>
    %cst_15 = arith.constant 0.353553385 : f32
    %34 = vector.broadcast %cst_15 : f32 to vector<8x8xf32>
    %35 = arith.mulf %33, %34 : vector<8x8xf32>
    %36 = arith.truncf %35 : vector<8x8xf32> to vector<8x8xbf16>
    %c0_16 = arith.constant 0 : index
    %c0_17 = arith.constant 0 : index
    %c0_18 = arith.constant 0 : index
    %c0_19 = arith.constant 0 : index
    %37 = vector.load %arg8[%c0_16, %c0_17, %c0_18, %c0_19] : memref<1x1x8x8xbf16, #tpu.memory_space<vmem>>, vector<1x1x8x8xbf16>
    %38 = vector.shape_cast %37 : vector<1x1x8x8xbf16> to vector<8x8xbf16>
    %39 = vector.shape_cast %36 : vector<8x8xbf16> to vector<1x1x8x8xbf16>
    tpu.vector_store %arg8[%c0_16, %c0_17, %c0_18, %c0_19], %39 {strides = array<i32>} : memref<1x1x8x8xbf16, #tpu.memory_space<vmem>>, vector<1x1x8x8xbf16>,
    %40 = arith.mulf %22, %24 : vector<8x8xf32>
    %41 = vector.extract_strided_slice %22 {offsets = [0, 4], sizes = [8, 4], strides = [1, 1]} : vector<8x8xf32> to vector<8x4xf32>
    %cst_20 = arith.constant 0.000000e+00 : f32
    %42 = vector.broadcast %cst_20 : f32 to vector<8x4xf32>
    %43 = arith.subf %42, %41 : vector<8x4xf32>
    %44 = vector.extract_strided_slice %22 {offsets = [0, 0], sizes = [8, 4], strides = [1, 1]} : vector<8x8xf32> to vector<8x4xf32>
    %45 = tpu.concatenate %43, %44 in 1 : vector<8x4xf32>, vector<8x4xf32> -> vector<8x8xf32>
    %46 = arith.mulf %45, %25 : vector<8x8xf32>
    %47 = arith.addf %40, %46 : vector<8x8xf32>
    %48 = arith.truncf %47 : vector<8x8xf32> to vector<8x8xbf16>
    %c0_21 = arith.constant 0 : index
    %c0_22 = arith.constant 0 : index
    %c0_23 = arith.constant 0 : index
    %c0_24 = arith.constant 0 : index
    %49 = vector.load %arg9[%c0_21, %c0_22, %c0_23, %c0_24] : memref<1x1x8x8xbf16, #tpu.memory_space<vmem>>, vector<1x1x8x8xbf16>
    %50 = vector.shape_cast %49 : vector<1x1x8x8xbf16> to vector<8x8xbf16>
    %51 = vector.shape_cast %48 : vector<8x8xbf16> to vector<1x1x8x8xbf16>
    tpu.vector_store %arg9[%c0_21, %c0_22, %c0_23, %c0_24], %51 {strides = array<i32>} : memref<1x1x8x8xbf16, #tpu.memory_space<vmem>>, vector<1x1x8x8xbf16>,
    %52 = arith.truncf %23 : vector<8x8xf32> to vector<8x8xbf16>
    %c0_25 = arith.constant 0 : index
    %c0_26 = arith.constant 0 : index
    %c0_27 = arith.constant 0 : index
    %c0_28 = arith.constant 0 : index
    %53 = vector.load %arg10[%c0_25, %c0_26, %c0_27, %c0_28] : memref<1x1x8x8xbf16, #tpu.memory_space<vmem>>, vector<1x1x8x8xbf16>
    %54 = vector.shape_cast %53 : vector<1x1x8x8xbf16> to vector<8x8xbf16>
    %55 = vector.shape_cast %52 : vector<8x8xbf16> to vector<1x1x8x8xbf16>
    tpu.vector_store %arg10[%c0_25, %c0_26, %c0_27, %c0_28], %55 {strides = array<i32>} : memref<1x1x8x8xbf16, #tpu.memory_space<vmem>>, vector<1x1x8x8xbf16>,
    return
  }
  func.func @transform_0(%arg0: i32, %arg1: i32, %arg2: i32) -> (i32, i32, i32) {
    %c0_i32 = arith.constant 0 : i32
    %c0_i32_0 = arith.constant 0 : i32
    return %arg0, %arg1, %c0_i32 : i32, i32, i32
  }
  func.func @transform_1(%arg0: i32, %arg1: i32, %arg2: i32) -> (i32, i32) {
    %c0_i32 = arith.constant 0 : i32
    %c0_i32_0 = arith.constant 0 : i32
    %c0_i32_1 = arith.constant 0 : i32
    return %c0_i32, %c0_i32_0 : i32, i32
  }
  func.func @transform_2(%arg0: i32, %arg1: i32, %arg2: i32) -> (i32, i32, i32) {
    %c0_i32 = arith.constant 0 : i32
    %c0_i32_0 = arith.constant 0 : i32
    %c0_i32_1 = arith.constant 0 : i32
    return %arg2, %c0_i32, %c0_i32_0 : i32, i32, i32
  }
  func.func @transform_3(%arg0: i32, %arg1: i32, %arg2: i32) -> (i32, i32) {
    %c0_i32 = arith.constant 0 : i32
    %c0_i32_0 = arith.constant 0 : i32
    return %arg1, %c0_i32 : i32, i32
  }
  func.func @transform_4(%arg0: i32, %arg1: i32, %arg2: i32) -> (i32, i32) {
    %c0_i32 = arith.constant 0 : i32
    %c0_i32_0 = arith.constant 0 : i32
    return %arg1, %c0_i32 : i32, i32
  }
  func.func @transform_5(%arg0: i32, %arg1: i32, %arg2: i32) -> (i32, i32, i32, i32) {
    %c0_i32 = arith.constant 0 : i32
    %c0_i32_0 = arith.constant 0 : i32
    return %arg0, %arg2, %arg1, %c0_i32 : i32, i32, i32, i32
  }
  func.func @transform_6(%arg0: i32, %arg1: i32, %arg2: i32) -> (i32, i32, i32, i32) {
    %c0_i32 = arith.constant 0 : i32
    %c0_i32_0 = arith.constant 0 : i32
    return %arg0, %arg2, %arg1, %c0_i32 : i32, i32, i32, i32
  }
  func.func @transform_7(%arg0: i32, %arg1: i32, %arg2: i32) -> (i32, i32, i32, i32) {
    %c0_i32 = arith.constant 0 : i32
    %c0_i32_0 = arith.constant 0 : i32
    return %arg0, %arg2, %arg1, %c0_i32 : i32, i32, i32, i32
  }
}

</mosaic_0001>

<llo_original>
// kernel: tpu_custom_call.1
$region0: #{tpu_custom_call.1}
  #allocation0 [shape = 'u32[]', space=smem, size = 0x4, offset = 0x4, fixed_abs, tag = 'smem constant byte address 0x4 - core index']
  #allocation1 [shape = 'u32[72,128]{1,0:T(1,128)}', space=vmem, size = 0x9000, scoped, tag = 'internal scratch']
  %s0 = inlined_call_operand.vmem [shape: f32[2,16,32], index: 0, kind: input, shape index: {}]
  %s1 = inlined_call_operand.vmem [shape: f32[1,32], index: 1, kind: input, shape index: {}]
  %s2 = inlined_call_operand.vmem [shape: bf16[4,32,24], index: 2, kind: input, shape index: {}]
  %s3 = inlined_call_operand.vmem [shape: f32[16,8], index: 3, kind: input, shape index: {}]
  %s4 = inlined_call_operand.vmem [shape: f32[16,8], index: 4, kind: input, shape index: {}]
  %s5 = inlined_call_operand.vmem [shape: bf16[2,4,16,8], index: 5, kind: output, shape index: {0}]
  %s6 = inlined_call_operand.vmem [shape: bf16[2,4,16,8], index: 6, kind: output, shape index: {1}]
  %s7 = inlined_call_operand.vmem [shape: bf16[2,4,16,8], index: 7, kind: output, shape index: {2}]
  %8 = xla_tuple %s5, %s6, %s7
  %s9 = sld [smem:[#allocation0]]
  $region69: #{tpu_custom_call.1} parent=0
    _
  %s11 = ssub.s32 1, %s9
  %s12 = scalar_select 0, %s11, %s9
  loop: start=0, step=1, limit=18
  $region2: #{tpu_custom_call.1} parent=0 // loop_pre_header
    _
  $region3: #{tpu_custom_call.1} parent=0 // loop_header
    %s14 = sphi 0, %s18
    %p15 = scmp.ge.s32.totalorder %s14, 18
    %s21 = sphi 0, %s40
    %s22 = sphi 0, %s36
    %s23 = sphi 0, %s32
    %s24 = sphi 0, %s21
    %s25 = sphi 0, %s22
    %s26 = sphi 0, %s23
    %s27 = sphi 0, %s24
    %s28 = sphi 0, %s25
    %s29 = sphi 0, %s26
    %s45 = sphi 0, %s47
    %s48 = sphi 0, %s45
    %s49 = sphi 0, %s48
    %s65 = sphi 0, %s49
    %s69 = sphi 0, %s69
    %s71 = sphi 0, %s69
    %s72 = sphi 0, %s71
    %s86 = sphi 0, %s72
    %s92 = sphi 0, %s94
    %s95 = sphi 0, %s92
    %s96 = sphi 0, %s95
    %s112 = sphi 0, %s96
    %s118 = sphi 0, %s120
    %s121 = sphi 0, %s118
    %s122 = sphi 0, %s121
    %s138 = sphi 0, %s122
    %s144 = sphi 0, %s146
    %s147 = sphi 0, %s144
    %s148 = sphi 0, %s147
    %s164 = sphi 0, %s148
    %s174 = sphi 0, %s176
    %s177 = sphi 0, %s174
    %s178 = sphi 0, %s177
    %s194 = sphi 0, %s178
    %s204 = sphi 0, %s206
    %s207 = sphi 0, %s204
    %s208 = sphi 0, %s207
    %s224 = sphi 0, %s208
    %s234 = sphi 0, %s236
    %s237 = sphi 0, %s234
    %s238 = sphi 0, %s237
    %s254 = sphi 0, %s238
  $region4: #{tpu_custom_call.1} parent=0 // loop_header_branch
    %17 = sbr.rel (%p15) target = $region8
  $region5: #{tpu_custom_call.1} parent=0 // loop_body
    %s19 = ssub.s32 %s14, 1
    %s20 = ssub.s32 %s14, 2
    %s30 = sadd.s32 1, %s23
    %p31 = scmp.ge.s32.totalorder %s30, 4
    %s32 = scalar_select %p31, 0, %s30
    %s33 = sadd.s32 1, %s22
    %s34 = scalar_select %p31, %s33, %s22
    %p35 = scmp.ge.s32.totalorder %s34, 2
    %s36 = scalar_select %p35, 0, %s34
    %s37 = sadd.s32 1, %s21
    %s38 = scalar_select %p35, %s37, %s21
    %p39 = scmp.ge.s32.totalorder %s38, 2
    %s40 = scalar_select %p39, 0, %s38
    %s41 = ssub.s32 %s21, %s40
    %s42 = ssub.s32 %s22, %s36
    %s43 = sor.u32 %s41, %s42
    %p44 = scmp.eq.s32.totalorder %s43, 0
    %s46 = sadd.s32 %s45, 1
    %s47 = scalar_select %p44, %s45, %s46
    %p50 = pneg %p44
    %p51 = scmp.eq.s32.totalorder %s14, 15
    %p52 = por %p50, %p51
    %p53 = scmp.ne.s32.totalorder %s45, %s48
    %p54 = scmp.eq.s32.totalorder %s14, 0
    %p55 = por %p53, %p54
    %p56 = scmp.ne.s32.totalorder %s45, %s48
    %p57 = scmp.eq.s32.totalorder %s19, 15
    %p58 = por %p56, %p57
    %p59 = scmp.ne.s32.totalorder %s48, %s49
    %p60 = scmp.eq.s32.totalorder %s19, 0
    %p61 = por %p59, %p60
    %p62 = scmp.ne.s32.totalorder %s48, %s49
    %p63 = scmp.eq.s32.totalorder %s20, 15
    %p64 = por %p62, %p63
    %p66 = scmp.ne.s32.totalorder %s49, %s65
    %p67 = scmp.eq.s32.totalorder %s20, 0
    %p68 = por %p66, %p67
    %s70 = sadd.s32 %s69, 1
    %p73 = scmp.eq.s32.totalorder %s14, 15
    %p74 = scmp.ne.s32.totalorder %s69, %s71
    %p75 = scmp.eq.s32.totalorder %s14, 0
    %p76 = por %p74, %p75
    %p77 = scmp.ne.s32.totalorder %s69, %s71
    %p78 = scmp.eq.s32.totalorder %s19, 15
    %p79 = por %p77, %p78
    %p80 = scmp.ne.s32.totalorder %s71, %s72
    %p81 = scmp.eq.s32.totalorder %s19, 0
    %p82 = por %p80, %p81
    %p83 = scmp.ne.s32.totalorder %s71, %s72
    %p84 = scmp.eq.s32.totalorder %s20, 15
    %p85 = por %p83, %p84
    %p87 = scmp.ne.s32.totalorder %s72, %s86
    %p88 = scmp.eq.s32.totalorder %s20, 0
    %p89 = por %p87, %p88
    %s90 = ssub.s32 %s23, %s32
    %p91 = scmp.eq.s32.totalorder %s90, 0
    %s93 = sadd.s32 %s92, 1
    %s94 = scalar_select %p91, %s92, %s93
    %p97 = pneg %p91
    %p98 = scmp.eq.s32.totalorder %s14, 15
    %p99 = por %p97, %p98
    %p100 = scmp.ne.s32.totalorder %s92, %s95
    %p101 = scmp.eq.s32.totalorder %s14, 0
    %p102 = por %p100, %p101
    %p103 = scmp.ne.s32.totalorder %s92, %s95
    %p104 = scmp.eq.s32.totalorder %s19, 15
    %p105 = por %p103, %p104
    %p106 = scmp.ne.s32.totalorder %s95, %s96
    %p107 = scmp.eq.s32.totalorder %s19, 0
    %p108 = por %p106, %p107
    %p109 = scmp.ne.s32.totalorder %s95, %s96
    %p110 = scmp.eq.s32.totalorder %s20, 15
    %p111 = por %p109, %p110
    %p113 = scmp.ne.s32.totalorder %s96, %s112
    %p114 = scmp.eq.s32.totalorder %s20, 0
    %p115 = por %p113, %p114
    %s116 = ssub.s32 %s22, %s36
    %p117 = scmp.eq.s32.totalorder %s116, 0
    %s119 = sadd.s32 %s118, 1
    %s120 = scalar_select %p117, %s118, %s119
    %p123 = pneg %p117
    %p124 = scmp.eq.s32.totalorder %s14, 15
    %p125 = por %p123, %p124
    %p126 = scmp.ne.s32.totalorder %s118, %s121
    %p127 = scmp.eq.s32.totalorder %s14, 0
    %p128 = por %p126, %p127
    %p129 = scmp.ne.s32.totalorder %s118, %s121
    %p130 = scmp.eq.s32.totalorder %s19, 15
    %p131 = por %p129, %p130
    %p132 = scmp.ne.s32.totalorder %s121, %s122
    %p133 = scmp.eq.s32.totalorder %s19, 0
    %p134 = por %p132, %p133
    %p135 = scmp.ne.s32.totalorder %s121, %s122
    %p136 = scmp.eq.s32.totalorder %s20, 15
    %p137 = por %p135, %p136
    %p139 = scmp.ne.s32.totalorder %s122, %s138
    %p140 = scmp.eq.s32.totalorder %s20, 0
    %p141 = por %p139, %p140
    %s142 = ssub.s32 %s22, %s36
    %p143 = scmp.eq.s32.totalorder %s142, 0
    %s145 = sadd.s32 %s144, 1
    %s146 = scalar_select %p143, %s144, %s145
    %p149 = pneg %p143
    %p150 = scmp.eq.s32.totalorder %s14, 15
    %p151 = por %p149, %p150
    %p152 = scmp.ne.s32.totalorder %s144, %s147
    %p153 = scmp.eq.s32.totalorder %s14, 0
    %p154 = por %p152, %p153
    %p155 = scmp.ne.s32.totalorder %s144, %s147
    %p156 = scmp.eq.s32.totalorder %s19, 15
    %p157 = por %p155, %p156
    %p158 = scmp.ne.s32.totalorder %s147, %s148
    %p159 = scmp.eq.s32.totalorder %s19, 0
    %p160 = por %p158, %p159
    %p161 = scmp.ne.s32.totalorder %s147, %s148
    %p162 = scmp.eq.s32.totalorder %s20, 15
    %p163 = por %p161, %p162
    %p165 = scmp.ne.s32.totalorder %s148, %s164
    %p166 = scmp.eq.s32.totalorder %s20, 0
    %p167 = por %p165, %p166
    %s168 = ssub.s32 %s21, %s40
    %s169 = ssub.s32 %s23, %s32
    %s170 = sor.u32 %s168, %s169
    %s171 = ssub.s32 %s22, %s36
    %s172 = sor.u32 %s170, %s171
    %p173 = scmp.eq.s32.totalorder %s172, 0
    %s175 = sadd.s32 %s174, 1
    %s176 = scalar_select %p173, %s174, %s175
    %p179 = pneg %p173
    %p180 = scmp.eq.s32.totalorder %s14, 15
    %p181 = por %p179, %p180
    %p182 = scmp.ne.s32.totalorder %s174, %s177
    %p183 = scmp.eq.s32.totalorder %s14, 0
    %p184 = por %p182, %p183
    %p185 = scmp.ne.s32.totalorder %s174, %s177
    %p186 = scmp.eq.s32.totalorder %s19, 15
    %p187 = por %p185, %p186
    %p188 = scmp.ne.s32.totalorder %s177, %s178
    %p189 = scmp.eq.s32.totalorder %s19, 0
    %p190 = por %p188, %p189
    %p191 = scmp.ne.s32.totalorder %s177, %s178
    %p192 = scmp.eq.s32.totalorder %s20, 15
    %p193 = por %p191, %p192
    %p195 = scmp.ne.s32.totalorder %s178, %s194
    %p196 = scmp.eq.s32.totalorder %s20, 0
    %p197 = por %p195, %p196
    %s198 = ssub.s32 %s21, %s40
    %s199 = ssub.s32 %s23, %s32
    %s200 = sor.u32 %s198, %s199
    %s201 = ssub.s32 %s22, %s36
    %s202 = sor.u32 %s200, %s201
    %p203 = scmp.eq.s32.totalorder %s202, 0
    %s205 = sadd.s32 %s204, 1
    %s206 = scalar_select %p203, %s204, %s205
    %p209 = pneg %p203
    %p210 = scmp.eq.s32.totalorder %s14, 15
    %p211 = por %p209, %p210
    %p212 = scmp.ne.s32.totalorder %s204, %s207
    %p213 = scmp.eq.s32.totalorder %s14, 0
    %p214 = por %p212, %p213
    %p215 = scmp.ne.s32.totalorder %s204, %s207
    %p216 = scmp.eq.s32.totalorder %s19, 15
    %p217 = por %p215, %p216
    %p218 = scmp.ne.s32.totalorder %s207, %s208
    %p219 = scmp.eq.s32.totalorder %s19, 0
    %p220 = por %p218, %p219
    %p221 = scmp.ne.s32.totalorder %s207, %s208
    %p222 = scmp.eq.s32.totalorder %s20, 15
    %p223 = por %p221, %p222
    %p225 = scmp.ne.s32.totalorder %s208, %s224
    %p226 = scmp.eq.s32.totalorder %s20, 0
    %p227 = por %p225, %p226
    %s228 = ssub.s32 %s21, %s40
    %s229 = ssub.s32 %s23, %s32
    %s230 = sor.u32 %s228, %s229
    %s231 = ssub.s32 %s22, %s36
    %s232 = sor.u32 %s230, %s231
    %p233 = scmp.eq.s32.totalorder %s232, 0
    %s235 = sadd.s32 %s234, 1
    %s236 = scalar_select %p233, %s234, %s235
    %p239 = pneg %p233
    %p240 = scmp.eq.s32.totalorder %s14, 15
    %p241 = por %p239, %p240
    %p242 = scmp.ne.s32.totalorder %s234, %s237
    %p243 = scmp.eq.s32.totalorder %s14, 0
    %p244 = por %p242, %p243
    %p245 = scmp.ne.s32.totalorder %s234, %s237
    %p246 = scmp.eq.s32.totalorder %s19, 15
    %p247 = por %p245, %p246
    %p248 = scmp.ne.s32.totalorder %s237, %s238
    %p249 = scmp.eq.s32.totalorder %s19, 0
    %p250 = por %p248, %p249
    %p251 = scmp.ne.s32.totalorder %s237, %s238
    %p252 = scmp.eq.s32.totalorder %s20, 15
    %p253 = por %p251, %p252
    %p255 = scmp.ne.s32.totalorder %s238, %s254
    %p256 = scmp.eq.s32.totalorder %s20, 0
    %p257 = por %p255, %p256
    %p258 = scmp.le.s32.totalorder 1, %s14
    %p259 = scmp.lt.s32.totalorder %s14, 17
    %p260 = pnand %p258, %p259
    %p261 = pneg %p260
    // Predicated region
    $region9: #{tpu_custom_call.1} parent=5 // pred_check
      _
    $region10: #{tpu_custom_call.1} parent=5 // pred_check_branch
      %263 = sbr.rel (%p260) target = $region12
    $region11: #{tpu_custom_call.1} parent=5 // pred_region
      %s264 = ssub.s32 %s14, 1
      // Predicated region
      $region13: #{tpu_custom_call.1} parent=11 // pred_check
        %p265 = pneg %p82
      $region14: #{tpu_custom_call.1} parent=11 // pred_check_branch
        %267 = sbr.rel (%p265) target = $region16
      $region15: #{tpu_custom_call.1} parent=11 // pred_region
        _
      $region16: #{tpu_custom_call.1} parent=11 // pred_fallthru
        _
    $region12: #{tpu_custom_call.1} parent=5 // pred_fallthru
      _
    %p268 = scmp.lt.s32.totalorder %s14, 16
    // Predicated region
    $region17: #{tpu_custom_call.1} parent=5 // pred_check
      %p269 = pneg %p268
    $region18: #{tpu_custom_call.1} parent=5 // pred_check_branch
      %271 = sbr.rel (%p269) target = $region20
    $region19: #{tpu_custom_call.1} parent=5 // pred_region
      // Predicated region
      $region21: #{tpu_custom_call.1} parent=19 // pred_check
        %p272 = pneg %p55
      $region22: #{tpu_custom_call.1} parent=19 // pred_check_branch
        %274 = sbr.rel (%p272) target = $region24
      $region23: #{tpu_custom_call.1} parent=19 // pred_region
        %p275 = scmp.lt.s32.totalorder %s21, 1
        %s276 = scalar_select %p275, %s21, 1
        %p277 = scmp.lt.s32.totalorder %s22, 1
        %s278 = scalar_select %p277, %s22, 1
        %s279 = smul.addr %s276, 2
        %s280 = sadd.s32 %s278, %s279
        %s281 = smul.addr %s280, 8
        %s282 = scalar_lea.vmem %s0, %s281
      $region24: #{tpu_custom_call.1} parent=19 // pred_fallthru
        _
      // Predicated region
      $region25: #{tpu_custom_call.1} parent=19 // pred_check
        %p283 = pneg %p102
      $region26: #{tpu_custom_call.1} parent=19 // pred_check_branch
        %285 = sbr.rel (%p283) target = $region28
      $region27: #{tpu_custom_call.1} parent=19 // pred_region
        %p286 = scmp.lt.s32.totalorder %s23, 3
        %s287 = scalar_select %p286, %s23, 3
        %s288 = smul.addr %s287, 4
        %s289 = smul.addr %s288, 4
        %s290 = scalar_lea.vmem %s2, %s289
      $region28: #{tpu_custom_call.1} parent=19 // pred_fallthru
        _
      // Predicated region
      $region29: #{tpu_custom_call.1} parent=19 // pred_check
        %p291 = pneg %p128
      $region30: #{tpu_custom_call.1} parent=19 // pred_check_branch
        %293 = sbr.rel (%p291) target = $region32
      $region31: #{tpu_custom_call.1} parent=19 // pred_region
        %p294 = scmp.lt.s32.totalorder %s22, 1
        %s295 = scalar_select %p294, %s22, 1
        %s296 = smul.addr %s295, 8
        %s297 = scalar_lea.vmem %s3, %s296
      $region32: #{tpu_custom_call.1} parent=19 // pred_fallthru
        _
      // Predicated region
      $region33: #{tpu_custom_call.1} parent=19 // pred_check
        %p298 = pneg %p154
      $region34: #{tpu_custom_call.1} parent=19 // pred_check_branch
        %300 = sbr.rel (%p298) target = $region36
      $region35: #{tpu_custom_call.1} parent=19 // pred_region
        %p301 = scmp.lt.s32.totalorder %s22, 1
        %s302 = scalar_select %p301, %s22, 1
        %s303 = smul.addr %s302, 8
        %s304 = scalar_lea.vmem %s4, %s303
      $region36: #{tpu_custom_call.1} parent=19 // pred_fallthru
        _
    $region20: #{tpu_custom_call.1} parent=5 // pred_fallthru
      _
    %p305 = scmp.le.s32.totalorder 1, %s14
    %p306 = scmp.lt.s32.totalorder %s14, 17
    %p307 = pnand %p305, %p306
    %p308 = pneg %p307
    // Predicated region
    $region37: #{tpu_custom_call.1} parent=5 // pred_check
      _
    $region38: #{tpu_custom_call.1} parent=5 // pred_check_branch
      %310 = sbr.rel (%p307) target = $region40
    $region39: #{tpu_custom_call.1} parent=5 // pred_region
      %s311 = ssub.s32 %s14, 1
      %p312 = scmp.lt.s32.totalorder %s24, 1
      %s313 = scalar_select %p312, %s24, 1
      %p314 = scmp.lt.s32.totalorder %s25, 1
      %s315 = scalar_select %p314, %s25, 1
      %s316 = smul.addr %s313, 2
      %s317 = sadd.s32 %s315, %s316
      %s318 = smul.addr %s317, 8
      %s319 = scalar_lea.vmem %s0, %s318
      %p320 = pneg %p61
      %p321 = pneg %p58
      %p322 = pneg %p82
      %p323 = pneg %p79
      %p324 = scmp.lt.s32.totalorder %s26, 3
      %s325 = scalar_select %p324, %s26, 3
      %s326 = smul.addr %s325, 4
      %s327 = smul.addr %s326, 4
      %s328 = scalar_lea.vmem %s2, %s327
      %p329 = pneg %p108
      %p330 = pneg %p105
      %p331 = scmp.lt.s32.totalorder %s25, 1
      %s332 = scalar_select %p331, %s25, 1
      %s333 = smul.addr %s332, 8
      %s334 = scalar_lea.vmem %s3, %s333
      %p335 = pneg %p134
      %p336 = pneg %p131
      %p337 = scmp.lt.s32.totalorder %s25, 1
      %s338 = scalar_select %p337, %s25, 1
      %s339 = smul.addr %s338, 8
      %s340 = scalar_lea.vmem %s4, %s339
      %p341 = pneg %p160
      %p342 = pneg %p157
      %p343 = pneg %p190
      %p344 = pneg %p187
      %p345 = scmp.lt.s32.totalorder %s24, 1
      %s346 = scalar_select %p345, %s24, 1
      %p347 = scmp.lt.s32.totalorder %s26, 3
      %s348 = scalar_select %p347, %s26, 3
      %p349 = scmp.lt.s32.totalorder %s25, 1
      %s350 = scalar_select %p349, %s25, 1
      %s351 = smul.addr %s348, 2
      %s352 = sadd.s32 %s350, %s351
      %s353 = smul.addr %s346, 8
      %s354 = sadd.s32 %s352, %s353
      %s355 = smul.addr %s354, 4
      %s356 = scalar_lea.vmem %s5, %s355
      %p357 = pneg %p220
      %p358 = pneg %p217
      %p359 = scmp.lt.s32.totalorder %s24, 1
      %s360 = scalar_select %p359, %s24, 1
      %p361 = scmp.lt.s32.totalorder %s26, 3
      %s362 = scalar_select %p361, %s26, 3
      %p363 = scmp.lt.s32.totalorder %s25, 1
      %s364 = scalar_select %p363, %s25, 1
      %s365 = smul.addr %s362, 2
      %s366 = sadd.s32 %s364, %s365
      %s367 = smul.addr %s360, 8
      %s368 = sadd.s32 %s366, %s367
      %s369 = smul.addr %s368, 4
      %s370 = scalar_lea.vmem %s6, %s369
      %p371 = pneg %p250
      %p372 = pneg %p247
      %p373 = scmp.lt.s32.totalorder %s24, 1
      %s374 = scalar_select %p373, %s24, 1
      %p375 = scmp.lt.s32.totalorder %s26, 3
      %s376 = scalar_select %p375, %s26, 3
      %p377 = scmp.lt.s32.totalorder %s25, 1
      %s378 = scalar_select %p377, %s25, 1
      %s379 = smul.addr %s376, 2
      %s380 = sadd.s32 %s378, %s379
      %s381 = smul.addr %s374, 8
      %s382 = sadd.s32 %s380, %s381
      %s383 = smul.addr %s382, 4
      %s384 = scalar_lea.vmem %s7, %s383
      %p385 = scmp.lt.s32.totalorder %s24, 1
      %s386 = scalar_select %p385, %s24, 1
      %p387 = scmp.lt.s32.totalorder %s25, 1
      %s388 = scalar_select %p387, %s25, 1
      %s389 = smul.addr %s386, 2
      %s390 = sadd.s32 %s388, %s389
      %s391 = smul.addr %s390, 8
      %s392 = scalar_lea.vmem %s0, %s391
      %p393 = scmp.lt.s32.totalorder %s26, 3
      %s394 = scalar_select %p393, %s26, 3
      %s395 = smul.addr %s394, 4
      %s396 = smul.addr %s395, 4
      %s397 = scalar_lea.vmem %s2, %s396
      %p398 = scmp.lt.s32.totalorder %s25, 1
      %s399 = scalar_select %p398, %s25, 1
      %s400 = smul.addr %s399, 8
      %s401 = scalar_lea.vmem %s3, %s400
      %p402 = scmp.lt.s32.totalorder %s25, 1
      %s403 = scalar_select %p402, %s25, 1
      %s404 = smul.addr %s403, 8
      %s405 = scalar_lea.vmem %s4, %s404
      %p406 = scmp.lt.s32.totalorder %s24, 1
      %s407 = scalar_select %p406, %s24, 1
      %p408 = scmp.lt.s32.totalorder %s26, 3
      %s409 = scalar_select %p408, %s26, 3
      %p410 = scmp.lt.s32.totalorder %s25, 1
      %s411 = scalar_select %p410, %s25, 1
      %s412 = smul.addr %s409, 2
      %s413 = sadd.s32 %s411, %s412
      %s414 = smul.addr %s407, 8
      %s415 = sadd.s32 %s413, %s414
      %s416 = smul.addr %s415, 4
      %s417 = scalar_lea.vmem %s5, %s416
      %p418 = scmp.lt.s32.totalorder %s24, 1
      %s419 = scalar_select %p418, %s24, 1
      %p420 = scmp.lt.s32.totalorder %s26, 3
      %s421 = scalar_select %p420, %s26, 3
      %p422 = scmp.lt.s32.totalorder %s25, 1
      %s423 = scalar_select %p422, %s25, 1
      %s424 = smul.addr %s421, 2
      %s425 = sadd.s32 %s423, %s424
      %s426 = smul.addr %s419, 8
      %s427 = sadd.s32 %s425, %s426
      %s428 = smul.addr %s427, 4
      %s429 = scalar_lea.vmem %s6, %s428
      %p430 = scmp.lt.s32.totalorder %s24, 1
      %s431 = scalar_select %p430, %s24, 1
      %p432 = scmp.lt.s32.totalorder %s26, 3
      %s433 = scalar_select %p432, %s26, 3
      %p434 = scmp.lt.s32.totalorder %s25, 1
      %s435 = scalar_select %p434, %s25, 1
      %s436 = smul.addr %s433, 2
      %s437 = sadd.s32 %s435, %s436
      %s438 = smul.addr %s431, 8
      %s439 = sadd.s32 %s437, %s438
      %s440 = smul.addr %s439, 4
      %s441 = scalar_lea.vmem %s7, %s440
      %v443 = vld [vmem:[%s392] sm:$0xff]
      %v444 = vmul.f32 %v443, %v443
      %vm445 = vcmask 261120
      %v446 = vsel %vm445, %v444, 0.0
      %447 = vadd.xlane.f32.xlu0 %v446
      %v448 = vpop.xlane.xlu0 %447
      %v449 = vrcp.pop 32.0
      %v450 = vmul.f32 32.0, %v449
      %v451 = vsub.f32 1.0, %v450
      %v452 = vmul.f32 %v449, %v451
      %v453 = vadd.f32 %v449, %v452
      %vm454 = vweird.f32 %v449
      %v455 = vsel %vm454, %v449, %v453
      %v456 = vmul.f32 %v448, %v455
      %v457 = vadd.f32 %v456, 1e-05
      %v458 = vrsqrt.pop %v457
      %v459 = vmul.f32 %v458, %v457
      %v460 = vmul.f32 %v459, %v458
      %v461 = vmul.f32 0.5, %v460
      %v462 = vsub.f32 1.5, %v461
      %v463 = vmul.f32 %v458, %v462
      %vm464 = vweird.f32 %v457
      %vm465 = vweird.f32 %v458
      %vm466 = vmor %vm464, %vm465
      %v467 = vsel %vm466, %v458, %v463
      %v468 = vmul.f32 %v443, %v467
      %v469 = vld [vmem:[%s1] sm:$0x1]
      %v471 = vperm.slane %v469, 0
      %v473 = vmul.f32 %v468, %v471
      %v474 = vpack.c.bf16 %v473, %v473
      %v475 = vld [vmem:[%s397] sm:$0xf]
      %v476 = vld [vmem:[%s397 + $0x4] sm:$0xf]
      %v477 = vld [vmem:[%s397 + $0x8] sm:$0xf]
      %v478 = vld [vmem:[%s397 + $0xc] sm:$0xf]
      %v483 = vunpack.c.l.b16 %v475
      %v484 = vunpack.c.l.b16 %v476
      %v485 = vunpack.c.l.b16 %v477
      %v486 = vunpack.c.l.b16 %v478
      %v487 = vpack.c.b16 %v484, %v483
      %v488 = vpack.c.b16 %v486, %v485
      %v492 = vsel %vm445, %v474, 0
      %494 = vmatpush.bf16.msra.mxu0 0
      %495 = vmatpush.bf16.msra.mxu0 0
      %496 = vmatpush.bf16.msra.mxu0 0
      %497 = vmatpush.bf16.msra.mxu0 0
      %498 = vmatpush.bf16.msra.mxu0 0
      %499 = vmatpush.bf16.msra.mxu0 0
      %500 = vmatpush.bf16.msra.mxu0 %v488
      %501 = vmatpush.bf16.msra.mxu0 %v487
      %502 = vmatmul.bf16.gmra.mxu0 %v492
      %v503 = vpop.f32.mrf.mxu0
      %v504 = vadd.f32 0.0, %v503
      %v505 = vpop.f32.mrf.mxu0
      %506 = vdwg.mxu0
      %v507 = vld [vmem:[%s401] sm:$0xff]
      %v508 = vld [vmem:[%s405] sm:$0xff]
      %v509 = vmul.f32 %v504, %v507
      %v510 = vsub.f32 0.0, %v504
      %512 = vrot.lane.b32.xlu0 %v510, 124
      %v513 = vpop.permute.xlu0 %512
      %516 = vrot.lane.b32.xlu0 %v504, 4
      %v517 = vpop.permute.xlu0 %516
      %vm519 = vcmask 31744
      %v520 = vsel %vm519, %v513, %v517
      %v521 = vmul.f32 %v520, %v508
      %v522 = vadd.f32 %v509, %v521
      %v523 = vmul.f32 %v522, 0.35355338
      %v524 = vpack.c.bf16 %v523, %v523
      %vm525 = vcmask 60416
      %526 = vst.msk [vmem:[%s417] sm:$0xf] %vm525, %v524
      %528 = vrot.lane.b32.xlu0 %v507, 8
      %v529 = vpop.permute.xlu0 %528
      %v531 = vmul.f32 %v504, %v529
      %532 = vrot.lane.b32.xlu0 %v510, 116
      %v533 = vpop.permute.xlu0 %532
      %535 = vrot.lane.b32.xlu0 %v504, 124
      %v536 = vpop.permute.xlu0 %535
      %v538 = vsel %vm519, %v533, %v536
      %v539 = vmul.f32 %v538, %v508
      %541 = vrot.lane.b32.xlu0 %v539, 8
      %v542 = vpop.permute.xlu0 %541
      %v544 = vadd.f32 %v531, %v542
      %v545 = vpack.c.bf16 %v544, %v544
      %547 = vrot.lane.b32.xlu0 %v545, 120
      %v548 = vpop.permute.xlu0 %547
      %550 = vst.msk [vmem:[%s429] sm:$0xf] %vm525, %v548
      %v551 = vpack.c.bf16 %v504, %v504
      %553 = vrot.lane.b32.xlu0 %v551, 112
      %v554 = vpop.permute.xlu0 %553
      %556 = vst.msk [vmem:[%s441] sm:$0xf] %vm525, %v554
      %p557 = scmp.lt.s32.totalorder %s24, 1
      %s558 = scalar_select %p557, %s24, 1
      %p559 = scmp.lt.s32.totalorder %s26, 3
      %s560 = scalar_select %p559, %s26, 3
      %p561 = scmp.lt.s32.totalorder %s25, 1
      %s562 = scalar_select %p561, %s25, 1
      %s563 = smul.addr %s560, 2
      %s564 = sadd.s32 %s562, %s563
      %s565 = smul.addr %s558, 8
      %s566 = sadd.s32 %s564, %s565
      %s567 = smul.addr %s566, 4
      %s568 = scalar_lea.vmem %s5, %s567
      %p569 = scmp.lt.s32.totalorder %s24, 1
      %s570 = scalar_select %p569, %s24, 1
      %p571 = scmp.lt.s32.totalorder %s26, 3
      %s572 = scalar_select %p571, %s26, 3
      %p573 = scmp.lt.s32.totalorder %s25, 1
      %s574 = scalar_select %p573, %s25, 1
      %s575 = smul.addr %s572, 2
      %s576 = sadd.s32 %s574, %s575
      %s577 = smul.addr %s570, 8
      %s578 = sadd.s32 %s576, %s577
      %s579 = smul.addr %s578, 4
      %s580 = scalar_lea.vmem %s6, %s579
      %p581 = scmp.lt.s32.totalorder %s24, 1
      %s582 = scalar_select %p581, %s24, 1
      %p583 = scmp.lt.s32.totalorder %s26, 3
      %s584 = scalar_select %p583, %s26, 3
      %p585 = scmp.lt.s32.totalorder %s25, 1
      %s586 = scalar_select %p585, %s25, 1
      %s587 = smul.addr %s584, 2
      %s588 = sadd.s32 %s586, %s587
      %s589 = smul.addr %s582, 8
      %s590 = sadd.s32 %s588, %s589
      %s591 = smul.addr %s590, 4
      %s592 = scalar_lea.vmem %s7, %s591
      // Predicated region
      $region41: #{tpu_custom_call.1} parent=39 // pred_check
        %p593 = pneg %p187
      $region42: #{tpu_custom_call.1} parent=39 // pred_check_branch
        %595 = sbr.rel (%p593) target = $region44
      $region43: #{tpu_custom_call.1} parent=39 // pred_region
        _
      $region44: #{tpu_custom_call.1} parent=39 // pred_fallthru
        _
      // Predicated region
      $region45: #{tpu_custom_call.1} parent=39 // pred_check
        %p596 = pneg %p217
      $region46: #{tpu_custom_call.1} parent=39 // pred_check_branch
        %598 = sbr.rel (%p596) target = $region48
      $region47: #{tpu_custom_call.1} parent=39 // pred_region
        _
      $region48: #{tpu_custom_call.1} parent=39 // pred_fallthru
        _
      // Predicated region
      $region49: #{tpu_custom_call.1} parent=39 // pred_check
        %p599 = pneg %p247
      $region50: #{tpu_custom_call.1} parent=39 // pred_check_branch
        %601 = sbr.rel (%p599) target = $region52
      $region51: #{tpu_custom_call.1} parent=39 // pred_region
        _
      $region52: #{tpu_custom_call.1} parent=39 // pred_fallthru
        _
    $region40: #{tpu_custom_call.1} parent=5 // pred_fallthru
      _
    %p602 = scmp.le.s32.totalorder 2, %s14
    // Predicated region
    $region53: #{tpu_custom_call.1} parent=5 // pred_check
      %p603 = pneg %p602
    $region54: #{tpu_custom_call.1} parent=5 // pred_check_branch
      %605 = sbr.rel (%p603) target = $region56
    $region55: #{tpu_custom_call.1} parent=5 // pred_region
      %s606 = ssub.s32 %s14, 2
      // Predicated region
      $region57: #{tpu_custom_call.1} parent=55 // pred_check
        %p607 = pneg %p193
      $region58: #{tpu_custom_call.1} parent=55 // pred_check_branch
        %609 = sbr.rel (%p607) target = $region60
      $region59: #{tpu_custom_call.1} parent=55 // pred_region
        %p610 = scmp.lt.s32.totalorder %s27, 1
        %s611 = scalar_select %p610, %s27, 1
        %p612 = scmp.lt.s32.totalorder %s29, 3
        %s613 = scalar_select %p612, %s29, 3
        %p614 = scmp.lt.s32.totalorder %s28, 1
        %s615 = scalar_select %p614, %s28, 1
        %s616 = smul.addr %s613, 2
        %s617 = sadd.s32 %s615, %s616
        %s618 = smul.addr %s611, 8
        %s619 = sadd.s32 %s617, %s618
        %s620 = smul.addr %s619, 4
        %s621 = scalar_lea.vmem %s5, %s620
      $region60: #{tpu_custom_call.1} parent=55 // pred_fallthru
        _
      // Predicated region
      $region61: #{tpu_custom_call.1} parent=55 // pred_check
        %p622 = pneg %p223
      $region62: #{tpu_custom_call.1} parent=55 // pred_check_branch
        %624 = sbr.rel (%p622) target = $region64
      $region63: #{tpu_custom_call.1} parent=55 // pred_region
        %p625 = scmp.lt.s32.totalorder %s27, 1
        %s626 = scalar_select %p625, %s27, 1
        %p627 = scmp.lt.s32.totalorder %s29, 3
        %s628 = scalar_select %p627, %s29, 3
        %p629 = scmp.lt.s32.totalorder %s28, 1
        %s630 = scalar_select %p629, %s28, 1
        %s631 = smul.addr %s628, 2
        %s632 = sadd.s32 %s630, %s631
        %s633 = smul.addr %s626, 8
        %s634 = sadd.s32 %s632, %s633
        %s635 = smul.addr %s634, 4
        %s636 = scalar_lea.vmem %s6, %s635
      $region64: #{tpu_custom_call.1} parent=55 // pred_fallthru
        _
      // Predicated region
      $region65: #{tpu_custom_call.1} parent=55 // pred_check
        %p637 = pneg %p253
      $region66: #{tpu_custom_call.1} parent=55 // pred_check_branch
        %639 = sbr.rel (%p637) target = $region68
      $region67: #{tpu_custom_call.1} parent=55 // pred_region
        %p640 = scmp.lt.s32.totalorder %s27, 1
        %s641 = scalar_select %p640, %s27, 1
        %p642 = scmp.lt.s32.totalorder %s29, 3
        %s643 = scalar_select %p642, %s29, 3
        %p644 = scmp.lt.s32.totalorder %s28, 1
        %s645 = scalar_select %p644, %s28, 1
        %s646 = smul.addr %s643, 2
        %s647 = sadd.s32 %s645, %s646
        %s648 = smul.addr %s641, 8
        %s649 = sadd.s32 %s647, %s648
        %s650 = smul.addr %s649, 4
        %s651 = scalar_lea.vmem %s7, %s650
      $region68: #{tpu_custom_call.1} parent=55 // pred_fallthru
        _
    $region56: #{tpu_custom_call.1} parent=5 // pred_fallthru
      _
  $region6: #{tpu_custom_call.1} parent=0 // loop_footer
    %s18 = sadd.s32 1, %s14
  $region7: #{tpu_custom_call.1} parent=0 // loop_footer_branch
    %13 = sbr.rel target = $region3
  $region8: #{tpu_custom_call.1} parent=0 // loop_exit
    _

</llo_original>
